<compile_context>
chip_gen: v6e
topology: v6e:2x2x1
jax: 0.10.0
libtpu: 0.0.40
codegen_flags: <defaults>
</compile_context>

<pallas_src>
import jax
import jax.numpy as jnp
import numpy as np
from jax import lax
from jax.experimental import pallas as pl
from jax.experimental.pallas import tpu as pltpu

# ---- Config ----------------------------------------------------------------
EMB_DIM = 32
HID_DIM = 32
NUM_DIRECTION = 1          # bidirectional = False
VOCAB_SIZE = 50
VOCAB_PAD = 128            # pad vocab to a full lane width for the one-hot matmul
TAG_SIZE = 8
BATCH = 8
SEQ = 8
# TODO(synk): nn.LSTM dropout=0.5 only applies between stacked layers; with
# layer_size=1 it is a no-op, so it is intentionally not implemented.


# ---- Pallas kernel ----------------------------------------------------------
def lstm_kernel(tok_ref, xgt_ref, whh_ref, wc_ref, bc_ref, out_ref):
    """Fused forward: one-hot embedding/input-projection gather, LSTM
    recurrence, and the final-timestep classifier.

    tok_ref : (S*B, 1) int32   time-major tokens (row r = t*B + b)
    xgt_ref : (VPAD, 4H) f32   precomputed  embedding @ W_ih^T + (b_ih + b_hh)
    whh_ref : (H, 4H)    f32   hidden->gates weight (pre-transposed)
    wc_ref  : (H, T)     f32   classifier weight (pre-transposed)
    bc_ref  : (1, T)     f32   classifier bias
    out_ref : (B, T)     f32   logits
    """
    SB = tok_ref.shape[0]
    H = whh_ref.shape[0]
    B = out_ref.shape[0]
    S = SB // B
    VPAD = xgt_ref.shape[0]

    # ---- embedding gather + input projection as ONE MXU one-hot matmul ------
    tok = tok_ref[...]                                            # (S*B, 1) i32
    vocab_iota = lax.broadcasted_iota(jnp.int32, (SB, VPAD), 1)   # (S*B, VPAD)
    onehot = (vocab_iota == tok).astype(jnp.float32)              # exact 0/1
    xg = jnp.dot(onehot, xgt_ref[...],
                 preferred_element_type=jnp.float32)              # (S*B, 4H)

    whh = whh_ref[...]                     # hoisted: read once, reused each step

    # sigmoid(x) = 0.5*tanh(0.5*x) + 0.5  ->  single full-vreg tanh per step.
    # Hoisted lane constants: scale = {0.5,0.5,1.0,0.5}, offset = {0.5,0.5,0,0.5}
    lane = lax.broadcasted_iota(jnp.int32, (1, 4 * H), 1)
    is_g = (lane >= 2 * H) & (lane < 3 * H)
    scale = jnp.where(is_g, 1.0, 0.5).astype(jnp.float32)
    offset = jnp.where(is_g, 0.0, 0.5).astype(jnp.float32)

    def activate(gates):
        t = jnp.tanh(gates * scale)        # one full-(8,128) EUP push
        act = t * scale + offset           # VPU fixup: i/f/o lanes -> sigmoid
        i = act[:, 0:H]
        f = act[:, H:2 * H]
        g = act[:, 2 * H:3 * H]
        o = act[:, 3 * H:4 * H]
        return i, f, g, o

    # t = 0 peeled: h == 0, so the recurrent matmul and the f*c term vanish.
    i0, _, g0, o0 = activate(xg[0:B, :])
    c = i0 * g0
    h = o0 * jnp.tanh(c)

    # Fully unrolled recurrence with h/c carried in vregs (no VMEM round trip).
    # TODO(synk): keeping W_hh staged in the MXU across steps via
    # pltpu.matmul_push_rhs/matmul_acc_lhs/matmul_pop was considered; skipped
    # because the accumulator-reuse semantics differ across MRF/MRB generations
    # and the small latency trim is not worth the risk here.
    for t in range(1, S):
        gates = xg[t * B:(t + 1) * B, :] + jnp.dot(
            h, whh, preferred_element_type=jnp.float32)
        i, f, g, o = activate(gates)
        c = f * c + i * g
        h = o * jnp.tanh(c)

    out_ref[...] = (jnp.dot(h, wc_ref[...], preferred_element_type=jnp.float32)
                    + bc_ref[...])


@jax.jit
def lstm_forward(tokens, kparams):
    """tokens: (B, S) int32 -> logits (B, TAG_SIZE). Single fused pallas_call."""
    B, S = tokens.shape
    tok_sb = tokens.T.reshape(S * B, 1)    # time-major rows: r = t*B + b (tiny op)
    vmem = pl.BlockSpec(memory_space=pltpu.MemorySpace.VMEM)
    return pl.pallas_call(
        lstm_kernel,
        out_shape=jax.ShapeDtypeStruct((B, TAG_SIZE), jnp.float32),
        in_specs=[vmem] * 5,
        out_specs=vmem,
    )(tok_sb, kparams["xg_table"], kparams["w_hh_t"],
      kparams["w_cls_t"], kparams["b_cls"])


# ---- Pure-JAX reference (for correctness check) -----------------------------
def lstm_reference(tokens, params):
    emb = jnp.take(params["embedding"], tokens, axis=0)   # (B, S, E)
    x = jnp.transpose(emb, (1, 0, 2))                     # (S, B, E)
    B = tokens.shape[0]
    h = jnp.zeros((B, HID_DIM), jnp.float32)
    c = jnp.zeros((B, HID_DIM), jnp.float32)

    def step(carry, x_t):
        h, c = carry
        gates = x_t @ params["w_ih_t"] + h @ params["w_hh_t"] + params["b_gates"]
        i = jax.nn.sigmoid(gates[:, 0:HID_DIM])
        f = jax.nn.sigmoid(gates[:, HID_DIM:2 * HID_DIM])
        g = jnp.tanh(gates[:, 2 * HID_DIM:3 * HID_DIM])
        o = jax.nn.sigmoid(gates[:, 3 * HID_DIM:4 * HID_DIM])
        c = f * c + i * g
        h = o * jnp.tanh(c)
        return (h, c), None

    (h, _), _ = lax.scan(step, (h, c), x)
    return h @ params["w_cls_t"] + params["b_cls"]


# ---- Deterministic parameter init -------------------------------------------
def init_params(key):
    ks = jax.random.split(key, 7)
    scale = 0.1
    embedding = scale * jax.random.normal(ks[0], (VOCAB_SIZE, EMB_DIM), jnp.float32)
    # PyTorch stores weight_ih_l0 as (4H, E); we pre-transpose for use here.
    w_ih = scale * jax.random.normal(ks[1], (4 * HID_DIM, EMB_DIM), jnp.float32)
    w_hh = scale * jax.random.normal(ks[2], (4 * HID_DIM, HID_DIM), jnp.float32)
    b_ih = scale * jax.random.normal(ks[3], (4 * HID_DIM,), jnp.float32)
    b_hh = scale * jax.random.normal(ks[4], (4 * HID_DIM,), jnp.float32)
    # Classifier: Linear(hidden_dim * num_direction, tag_size) -> weight (T, H).
    w_cls = scale * jax.random.normal(ks[5], (TAG_SIZE, HID_DIM * NUM_DIRECTION), jnp.float32)
    b_cls = scale * jax.random.normal(ks[6], (TAG_SIZE,), jnp.float32)
    return {
        "embedding": embedding,
        "w_ih_t": w_ih.T,                                  # (E, 4H)
        "w_hh_t": w_hh.T,                                  # (H, 4H)
        "b_gates": (b_ih + b_hh).reshape(1, 4 * HID_DIM),  # (1, 4H)
        "w_cls_t": w_cls.T,                                # (H, T)
        "b_cls": b_cls.reshape(1, TAG_SIZE),               # (1, T)
    }


def pack_kernel_params(params):
    """One-time constant folding for the fused kernel:
    embedding @ W_ih^T + bias -> padded (VOCAB_PAD, 4H) lookup table.
    (Inference-only packaging; mathematically identical to gather-then-project.)
    """
    xg_table = params["embedding"] @ params["w_ih_t"] + params["b_gates"]  # (V, 4H)
    xg_table = jnp.pad(xg_table, ((0, VOCAB_PAD - VOCAB_SIZE), (0, 0)))
    return {
        "xg_table": xg_table,              # (VOCAB_PAD, 4H)
        "w_hh_t": params["w_hh_t"],        # (H, 4H)
        "w_cls_t": params["w_cls_t"],      # (H, T)
        "b_cls": params["b_cls"],          # (1, T)
    }


if __name__ == "__main__":
    key = jax.random.PRNGKey(0)
    pkey, tkey = jax.random.split(key)
    params = init_params(pkey)
    kparams = pack_kernel_params(params)
    tokens = jax.random.randint(tkey, (BATCH, SEQ), 0, VOCAB_SIZE, dtype=jnp.int32)

    logits = jax.block_until_ready(lstm_forward(tokens, kparams))
    ref = jax.block_until_ready(lstm_reference(tokens, params))

    assert logits.shape == (BATCH, TAG_SIZE), logits.shape
    np.testing.assert_allclose(np.asarray(logits), np.asarray(ref),
                               rtol=1e-4, atol=1e-4)
    print("KERNEL_OK")
</pallas_src>

<mosaic_0001>
module attributes {stable_mosaic.version = 11 : i64} {
  func.func @lstm_kernel(%arg0: memref<64x1xi32, #tpu.memory_space<vmem>>, %arg1: memref<128x128xf32, #tpu.memory_space<vmem>>, %arg2: memref<32x128xf32, #tpu.memory_space<vmem>>, %arg3: memref<32x8xf32, #tpu.memory_space<vmem>>, %arg4: memref<1x8xf32, #tpu.memory_space<vmem>>, %arg5: memref<8x8xf32, #tpu.memory_space<vmem>>) attributes {dimension_semantics = [], scalar_prefetch = 0 : i64, scratch_operands = 0 : i64, tpu.core_type = #tpu.core_type<tc>} {
    %c0 = arith.constant 0 : index
    %c0_0 = arith.constant 0 : index
    %0 = vector.load %arg0[%c0, %c0_0] : memref<64x1xi32, #tpu.memory_space<vmem>>, vector<64x1xi32>
    %1 = tpu.iota {dimensions = array<i32: 1>} : vector<64x128xi32>
    %2 = vector.broadcast %0 : vector<64x1xi32> to vector<64x128xi32>
    %3 = arith.cmpi eq, %1, %2 : vector<64x128xi32>
    %4 = arith.extui %3 : vector<64x128xi1> to vector<64x128xi32>
    %5 = arith.sitofp %4 : vector<64x128xi32> to vector<64x128xf32>
    %c0_1 = arith.constant 0 : index
    %c0_2 = arith.constant 0 : index
    %6 = vector.load %arg1[%c0_1, %c0_2] : memref<128x128xf32, #tpu.memory_space<vmem>>, vector<128x128xf32>
    %cst = arith.constant dense<0.000000e+00> : vector<64x128xf32>
    %7 = tpu.matmul %5, %6, %cst {dimension_numbers = #tpu.dot_dimension_numbers<[1], [0], [0], [1], [0, 0, 1, 1], [], []>} : vector<64x128xf32>, vector<128x128xf32>, vector<64x128xf32> -> vector<64x128xf32>
    %c0_3 = arith.constant 0 : index
    %c0_4 = arith.constant 0 : index
    %8 = vector.load %arg2[%c0_3, %c0_4] : memref<32x128xf32, #tpu.memory_space<vmem>>, vector<32x128xf32>
    %9 = tpu.iota {dimensions = array<i32: 1>} : vector<1x128xi32>
    %c64_i32 = arith.constant 64 : i32
    %10 = vector.broadcast %c64_i32 : i32 to vector<1x128xi32>
    %11 = arith.cmpi sge, %9, %10 : vector<1x128xi32>
    %c96_i32 = arith.constant 96 : i32
    %12 = vector.broadcast %c96_i32 : i32 to vector<1x128xi32>
    %13 = arith.cmpi slt, %9, %12 : vector<1x128xi32>
    %14 = arith.andi %11, %13 : vector<1x128xi1>
    %cst_5 = arith.constant 1.000000e+00 : f32
    %cst_6 = arith.constant 5.000000e-01 : f32
    %15 = vector.broadcast %cst_5 : f32 to vector<1x128xf32>
    %16 = vector.broadcast %cst_6 : f32 to vector<1x128xf32>
    %17 = arith.select %14, %15, %16 : vector<1x128xi1>, vector<1x128xf32>
    %cst_7 = arith.constant 0.000000e+00 : f32
    %cst_8 = arith.constant 5.000000e-01 : f32
    %18 = vector.broadcast %cst_7 : f32 to vector<1x128xf32>
    %19 = vector.broadcast %cst_8 : f32 to vector<1x128xf32>
    %20 = arith.select %14, %18, %19 : vector<1x128xi1>, vector<1x128xf32>
    %21 = vector.extract_strided_slice %7 {offsets = [0, 0], sizes = [8, 128], strides = [1, 1]} : vector<64x128xf32> to vector<8x128xf32>
    %22 = vector.broadcast %17 : vector<1x128xf32> to vector<8x128xf32>
    %23 = arith.mulf %21, %22 : vector<8x128xf32>
    %24 = math.tanh %23 : vector<8x128xf32>
    %25 = vector.broadcast %17 : vector<1x128xf32> to vector<8x128xf32>
    %26 = arith.mulf %24, %25 : vector<8x128xf32>
    %27 = vector.broadcast %20 : vector<1x128xf32> to vector<8x128xf32>
    %28 = arith.addf %26, %27 : vector<8x128xf32>
    %29 = vector.extract_strided_slice %28 {offsets = [0, 0], sizes = [8, 32], strides = [1, 1]} : vector<8x128xf32> to vector<8x32xf32>
    %30 = vector.extract_strided_slice %28 {offsets = [0, 64], sizes = [8, 32], strides = [1, 1]} : vector<8x128xf32> to vector<8x32xf32>
    %31 = vector.extract_strided_slice %28 {offsets = [0, 96], sizes = [8, 32], strides = [1, 1]} : vector<8x128xf32> to vector<8x32xf32>
    %32 = arith.mulf %29, %30 : vector<8x32xf32>
    %33 = math.tanh %32 : vector<8x32xf32>
    %34 = arith.mulf %31, %33 : vector<8x32xf32>
    %35 = vector.extract_strided_slice %7 {offsets = [8, 0], sizes = [8, 128], strides = [1, 1]} : vector<64x128xf32> to vector<8x128xf32>
    %cst_9 = arith.constant dense<0.000000e+00> : vector<8x128xf32>
    %36 = tpu.matmul %34, %8, %cst_9 {dimension_numbers = #tpu.dot_dimension_numbers<[1], [0], [0], [1], [0, 0, 1, 1], [], []>} : vector<8x32xf32>, vector<32x128xf32>, vector<8x128xf32> -> vector<8x128xf32>
    %37 = arith.addf %35, %36 : vector<8x128xf32>
    %38 = vector.broadcast %17 : vector<1x128xf32> to vector<8x128xf32>
    %39 = arith.mulf %37, %38 : vector<8x128xf32>
    %40 = math.tanh %39 : vector<8x128xf32>
    %41 = vector.broadcast %17 : vector<1x128xf32> to vector<8x128xf32>
    %42 = arith.mulf %40, %41 : vector<8x128xf32>
    %43 = vector.broadcast %20 : vector<1x128xf32> to vector<8x128xf32>
    %44 = arith.addf %42, %43 : vector<8x128xf32>
    %45 = vector.extract_strided_slice %44 {offsets = [0, 0], sizes = [8, 32], strides = [1, 1]} : vector<8x128xf32> to vector<8x32xf32>
    %46 = vector.extract_strided_slice %44 {offsets = [0, 32], sizes = [8, 32], strides = [1, 1]} : vector<8x128xf32> to vector<8x32xf32>
    %47 = vector.extract_strided_slice %44 {offsets = [0, 64], sizes = [8, 32], strides = [1, 1]} : vector<8x128xf32> to vector<8x32xf32>
    %48 = vector.extract_strided_slice %44 {offsets = [0, 96], sizes = [8, 32], strides = [1, 1]} : vector<8x128xf32> to vector<8x32xf32>
    %49 = arith.mulf %46, %32 : vector<8x32xf32>
    %50 = arith.mulf %45, %47 : vector<8x32xf32>
    %51 = arith.addf %49, %50 : vector<8x32xf32>
    %52 = math.tanh %51 : vector<8x32xf32>
    %53 = arith.mulf %48, %52 : vector<8x32xf32>
    %54 = vector.extract_strided_slice %7 {offsets = [16, 0], sizes = [8, 128], strides = [1, 1]} : vector<64x128xf32> to vector<8x128xf32>
    %cst_10 = arith.constant dense<0.000000e+00> : vector<8x128xf32>
    %55 = tpu.matmul %53, %8, %cst_10 {dimension_numbers = #tpu.dot_dimension_numbers<[1], [0], [0], [1], [0, 0, 1, 1], [], []>} : vector<8x32xf32>, vector<32x128xf32>, vector<8x128xf32> -> vector<8x128xf32>
    %56 = arith.addf %54, %55 : vector<8x128xf32>
    %57 = vector.broadcast %17 : vector<1x128xf32> to vector<8x128xf32>
    %58 = arith.mulf %56, %57 : vector<8x128xf32>
    %59 = math.tanh %58 : vector<8x128xf32>
    %60 = vector.broadcast %17 : vector<1x128xf32> to vector<8x128xf32>
    %61 = arith.mulf %59, %60 : vector<8x128xf32>
    %62 = vector.broadcast %20 : vector<1x128xf32> to vector<8x128xf32>
    %63 = arith.addf %61, %62 : vector<8x128xf32>
    %64 = vector.extract_strided_slice %63 {offsets = [0, 0], sizes = [8, 32], strides = [1, 1]} : vector<8x128xf32> to vector<8x32xf32>
    %65 = vector.extract_strided_slice %63 {offsets = [0, 32], sizes = [8, 32], strides = [1, 1]} : vector<8x128xf32> to vector<8x32xf32>
    %66 = vector.extract_strided_slice %63 {offsets = [0, 64], sizes = [8, 32], strides = [1, 1]} : vector<8x128xf32> to vector<8x32xf32>
    %67 = vector.extract_strided_slice %63 {offsets = [0, 96], sizes = [8, 32], strides = [1, 1]} : vector<8x128xf32> to vector<8x32xf32>
    %68 = arith.mulf %65, %51 : vector<8x32xf32>
    %69 = arith.mulf %64, %66 : vector<8x32xf32>
    %70 = arith.addf %68, %69 : vector<8x32xf32>
    %71 = math.tanh %70 : vector<8x32xf32>
    %72 = arith.mulf %67, %71 : vector<8x32xf32>
    %73 = vector.extract_strided_slice %7 {offsets = [24, 0], sizes = [8, 128], strides = [1, 1]} : vector<64x128xf32> to vector<8x128xf32>
    %cst_11 = arith.constant dense<0.000000e+00> : vector<8x128xf32>
    %74 = tpu.matmul %72, %8, %cst_11 {dimension_numbers = #tpu.dot_dimension_numbers<[1], [0], [0], [1], [0, 0, 1, 1], [], []>} : vector<8x32xf32>, vector<32x128xf32>, vector<8x128xf32> -> vector<8x128xf32>
    %75 = arith.addf %73, %74 : vector<8x128xf32>
    %76 = vector.broadcast %17 : vector<1x128xf32> to vector<8x128xf32>
    %77 = arith.mulf %75, %76 : vector<8x128xf32>
    %78 = math.tanh %77 : vector<8x128xf32>
    %79 = vector.broadcast %17 : vector<1x128xf32> to vector<8x128xf32>
    %80 = arith.mulf %78, %79 : vector<8x128xf32>
    %81 = vector.broadcast %20 : vector<1x128xf32> to vector<8x128xf32>
    %82 = arith.addf %80, %81 : vector<8x128xf32>
    %83 = vector.extract_strided_slice %82 {offsets = [0, 0], sizes = [8, 32], strides = [1, 1]} : vector<8x128xf32> to vector<8x32xf32>
    %84 = vector.extract_strided_slice %82 {offsets = [0, 32], sizes = [8, 32], strides = [1, 1]} : vector<8x128xf32> to vector<8x32xf32>
    %85 = vector.extract_strided_slice %82 {offsets = [0, 64], sizes = [8, 32], strides = [1, 1]} : vector<8x128xf32> to vector<8x32xf32>
    %86 = vector.extract_strided_slice %82 {offsets = [0, 96], sizes = [8, 32], strides = [1, 1]} : vector<8x128xf32> to vector<8x32xf32>
    %87 = arith.mulf %84, %70 : vector<8x32xf32>
    %88 = arith.mulf %83, %85 : vector<8x32xf32>
    %89 = arith.addf %87, %88 : vector<8x32xf32>
    %90 = math.tanh %89 : vector<8x32xf32>
    %91 = arith.mulf %86, %90 : vector<8x32xf32>
    %92 = vector.extract_strided_slice %7 {offsets = [32, 0], sizes = [8, 128], strides = [1, 1]} : vector<64x128xf32> to vector<8x128xf32>
    %cst_12 = arith.constant dense<0.000000e+00> : vector<8x128xf32>
    %93 = tpu.matmul %91, %8, %cst_12 {dimension_numbers = #tpu.dot_dimension_numbers<[1], [0], [0], [1], [0, 0, 1, 1], [], []>} : vector<8x32xf32>, vector<32x128xf32>, vector<8x128xf32> -> vector<8x128xf32>
    %94 = arith.addf %92, %93 : vector<8x128xf32>
    %95 = vector.broadcast %17 : vector<1x128xf32> to vector<8x128xf32>
    %96 = arith.mulf %94, %95 : vector<8x128xf32>
    %97 = math.tanh %96 : vector<8x128xf32>
    %98 = vector.broadcast %17 : vector<1x128xf32> to vector<8x128xf32>
    %99 = arith.mulf %97, %98 : vector<8x128xf32>
    %100 = vector.broadcast %20 : vector<1x128xf32> to vector<8x128xf32>
    %101 = arith.addf %99, %100 : vector<8x128xf32>
    %102 = vector.extract_strided_slice %101 {offsets = [0, 0], sizes = [8, 32], strides = [1, 1]} : vector<8x128xf32> to vector<8x32xf32>
    %103 = vector.extract_strided_slice %101 {offsets = [0, 32], sizes = [8, 32], strides = [1, 1]} : vector<8x128xf32> to vector<8x32xf32>
    %104 = vector.extract_strided_slice %101 {offsets = [0, 64], sizes = [8, 32], strides = [1, 1]} : vector<8x128xf32> to vector<8x32xf32>
    %105 = vector.extract_strided_slice %101 {offsets = [0, 96], sizes = [8, 32], strides = [1, 1]} : vector<8x128xf32> to vector<8x32xf32>
    %106 = arith.mulf %103, %89 : vector<8x32xf32>
    %107 = arith.mulf %102, %104 : vector<8x32xf32>
    %108 = arith.addf %106, %107 : vector<8x32xf32>
    %109 = math.tanh %108 : vector<8x32xf32>
    %110 = arith.mulf %105, %109 : vector<8x32xf32>
    %111 = vector.extract_strided_slice %7 {offsets = [40, 0], sizes = [8, 128], strides = [1, 1]} : vector<64x128xf32> to vector<8x128xf32>
    %cst_13 = arith.constant dense<0.000000e+00> : vector<8x128xf32>
    %112 = tpu.matmul %110, %8, %cst_13 {dimension_numbers = #tpu.dot_dimension_numbers<[1], [0], [0], [1], [0, 0, 1, 1], [], []>} : vector<8x32xf32>, vector<32x128xf32>, vector<8x128xf32> -> vector<8x128xf32>
    %113 = arith.addf %111, %112 : vector<8x128xf32>
    %114 = vector.broadcast %17 : vector<1x128xf32> to vector<8x128xf32>
    %115 = arith.mulf %113, %114 : vector<8x128xf32>
    %116 = math.tanh %115 : vector<8x128xf32>
    %117 = vector.broadcast %17 : vector<1x128xf32> to vector<8x128xf32>
    %118 = arith.mulf %116, %117 : vector<8x128xf32>
    %119 = vector.broadcast %20 : vector<1x128xf32> to vector<8x128xf32>
    %120 = arith.addf %118, %119 : vector<8x128xf32>
    %121 = vector.extract_strided_slice %120 {offsets = [0, 0], sizes = [8, 32], strides = [1, 1]} : vector<8x128xf32> to vector<8x32xf32>
    %122 = vector.extract_strided_slice %120 {offsets = [0, 32], sizes = [8, 32], strides = [1, 1]} : vector<8x128xf32> to vector<8x32xf32>
    %123 = vector.extract_strided_slice %120 {offsets = [0, 64], sizes = [8, 32], strides = [1, 1]} : vector<8x128xf32> to vector<8x32xf32>
    %124 = vector.extract_strided_slice %120 {offsets = [0, 96], sizes = [8, 32], strides = [1, 1]} : vector<8x128xf32> to vector<8x32xf32>
    %125 = arith.mulf %122, %108 : vector<8x32xf32>
    %126 = arith.mulf %121, %123 : vector<8x32xf32>
    %127 = arith.addf %125, %126 : vector<8x32xf32>
    %128 = math.tanh %127 : vector<8x32xf32>
    %129 = arith.mulf %124, %128 : vector<8x32xf32>
    %130 = vector.extract_strided_slice %7 {offsets = [48, 0], sizes = [8, 128], strides = [1, 1]} : vector<64x128xf32> to vector<8x128xf32>
    %cst_14 = arith.constant dense<0.000000e+00> : vector<8x128xf32>
    %131 = tpu.matmul %129, %8, %cst_14 {dimension_numbers = #tpu.dot_dimension_numbers<[1], [0], [0], [1], [0, 0, 1, 1], [], []>} : vector<8x32xf32>, vector<32x128xf32>, vector<8x128xf32> -> vector<8x128xf32>
    %132 = arith.addf %130, %131 : vector<8x128xf32>
    %133 = vector.broadcast %17 : vector<1x128xf32> to vector<8x128xf32>
    %134 = arith.mulf %132, %133 : vector<8x128xf32>
    %135 = math.tanh %134 : vector<8x128xf32>
    %136 = vector.broadcast %17 : vector<1x128xf32> to vector<8x128xf32>
    %137 = arith.mulf %135, %136 : vector<8x128xf32>
    %138 = vector.broadcast %20 : vector<1x128xf32> to vector<8x128xf32>
    %139 = arith.addf %137, %138 : vector<8x128xf32>
    %140 = vector.extract_strided_slice %139 {offsets = [0, 0], sizes = [8, 32], strides = [1, 1]} : vector<8x128xf32> to vector<8x32xf32>
    %141 = vector.extract_strided_slice %139 {offsets = [0, 32], sizes = [8, 32], strides = [1, 1]} : vector<8x128xf32> to vector<8x32xf32>
    %142 = vector.extract_strided_slice %139 {offsets = [0, 64], sizes = [8, 32], strides = [1, 1]} : vector<8x128xf32> to vector<8x32xf32>
    %143 = vector.extract_strided_slice %139 {offsets = [0, 96], sizes = [8, 32], strides = [1, 1]} : vector<8x128xf32> to vector<8x32xf32>
    %144 = arith.mulf %141, %127 : vector<8x32xf32>
    %145 = arith.mulf %140, %142 : vector<8x32xf32>
    %146 = arith.addf %144, %145 : vector<8x32xf32>
    %147 = math.tanh %146 : vector<8x32xf32>
    %148 = arith.mulf %143, %147 : vector<8x32xf32>
    %149 = vector.extract_strided_slice %7 {offsets = [56, 0], sizes = [8, 128], strides = [1, 1]} : vector<64x128xf32> to vector<8x128xf32>
    %cst_15 = arith.constant dense<0.000000e+00> : vector<8x128xf32>
    %150 = tpu.matmul %148, %8, %cst_15 {dimension_numbers = #tpu.dot_dimension_numbers<[1], [0], [0], [1], [0, 0, 1, 1], [], []>} : vector<8x32xf32>, vector<32x128xf32>, vector<8x128xf32> -> vector<8x128xf32>
    %151 = arith.addf %149, %150 : vector<8x128xf32>
    %152 = vector.broadcast %17 : vector<1x128xf32> to vector<8x128xf32>
    %153 = arith.mulf %151, %152 : vector<8x128xf32>
    %154 = math.tanh %153 : vector<8x128xf32>
    %155 = vector.broadcast %17 : vector<1x128xf32> to vector<8x128xf32>
    %156 = arith.mulf %154, %155 : vector<8x128xf32>
    %157 = vector.broadcast %20 : vector<1x128xf32> to vector<8x128xf32>
    %158 = arith.addf %156, %157 : vector<8x128xf32>
    %159 = vector.extract_strided_slice %158 {offsets = [0, 0], sizes = [8, 32], strides = [1, 1]} : vector<8x128xf32> to vector<8x32xf32>
    %160 = vector.extract_strided_slice %158 {offsets = [0, 32], sizes = [8, 32], strides = [1, 1]} : vector<8x128xf32> to vector<8x32xf32>
    %161 = vector.extract_strided_slice %158 {offsets = [0, 64], sizes = [8, 32], strides = [1, 1]} : vector<8x128xf32> to vector<8x32xf32>
    %162 = vector.extract_strided_slice %158 {offsets = [0, 96], sizes = [8, 32], strides = [1, 1]} : vector<8x128xf32> to vector<8x32xf32>
    %163 = arith.mulf %160, %146 : vector<8x32xf32>
    %164 = arith.mulf %159, %161 : vector<8x32xf32>
    %165 = arith.addf %163, %164 : vector<8x32xf32>
    %166 = math.tanh %165 : vector<8x32xf32>
    %167 = arith.mulf %162, %166 : vector<8x32xf32>
    %c0_16 = arith.constant 0 : index
    %c0_17 = arith.constant 0 : index
    %168 = vector.load %arg3[%c0_16, %c0_17] : memref<32x8xf32, #tpu.memory_space<vmem>>, vector<32x8xf32>
    %cst_18 = arith.constant dense<0.000000e+00> : vector<8x8xf32>
    %169 = tpu.matmul %167, %168, %cst_18 {dimension_numbers = #tpu.dot_dimension_numbers<[1], [0], [0], [1], [0, 0, 1, 1], [], []>} : vector<8x32xf32>, vector<32x8xf32>, vector<8x8xf32> -> vector<8x8xf32>
    %c0_19 = arith.constant 0 : index
    %c0_20 = arith.constant 0 : index
    %170 = vector.load %arg4[%c0_19, %c0_20] : memref<1x8xf32, #tpu.memory_space<vmem>>, vector<1x8xf32>
    %171 = vector.broadcast %170 : vector<1x8xf32> to vector<8x8xf32>
    %172 = arith.addf %169, %171 : vector<8x8xf32>
    %c0_21 = arith.constant 0 : index
    %c0_22 = arith.constant 0 : index
    %173 = vector.load %arg5[%c0_21, %c0_22] : memref<8x8xf32, #tpu.memory_space<vmem>>, vector<8x8xf32>
    tpu.vector_store %arg5[%c0_21, %c0_22], %172 {strides = array<i32>} : memref<8x8xf32, #tpu.memory_space<vmem>>, vector<8x8xf32>,
    return
  }
}

</mosaic_0001>

<llo_original>
// kernel: lstm_forward.1
$region0: #{lstm_forward.1}
  #allocation0 [shape = 'u32[]', space=smem, size = 0x4, offset = 0x4, fixed_abs, tag = 'smem constant byte address 0x4 - core index']
  #allocation1 [shape = 'u32[144,128]{1,0:T(1,128)}', space=vmem, size = 0x12000, scoped, tag = 'internal scratch']
  %s0 = inlined_call_operand.vmem [shape: s32[64,1], index: 0, kind: input, shape index: {}]
  %s1 = inlined_call_operand.vmem [shape: f32[128,128], index: 1, kind: input, shape index: {}]
  %s2 = inlined_call_operand.hbm [shape: f32[32,128], index: 2, kind: input, shape index: {}]
  %s3 = inlined_call_operand.vmem [shape: f32[32,8], index: 3, kind: input, shape index: {}]
  %s4 = inlined_call_operand.vmem [shape: f32[1,8], index: 4, kind: input, shape index: {}]
  %s5 = inlined_call_operand.hbm [shape: f32[8,8], index: 5, kind: output, shape index: {}]
  %s6 = sld [smem:[#allocation0]]
  $region34: #{lstm_forward.1} parent=0
    _
  %s8 = ssub.s32 1, %s6
  %s9 = scalar_select 0, %s8, %s6
  $region1: #{lstm_forward.1} parent=0
    #allocation2 [shape = 'u8[16384]{0}', space=vmem, size = 0x4000, scoped, tag = 'input window, operand 2, single buffered']
    #allocation3 [shape = 's32[1]{0}', space=sflag, size = 0x4, scoped, tag = 'scoped memory for lstm_forward.1']
    #allocation4 [shape = 's32[1]{0}', space=sflag, size = 0x4, scoped, tag = 'scoped memory for lstm_forward.1']
    #allocation5 [shape = 'u8[4096]{0}', space=vmem, size = 0x1000, scoped, tag = 'output window, operand 0, single buffered']
    %10 = vsyncpa [#allocation3], 0
    %11 = vsyncpa [#allocation4], 0
    // Predicated region
    $region2: #{lstm_forward.1} parent=1 // pred_check
      _
    $region3: #{lstm_forward.1} parent=1 // pred_check_branch
      %13 = sbr.rel (0) target = $region5
    $region4: #{lstm_forward.1} parent=1 // pred_region
      _
    $region5: #{lstm_forward.1} parent=1 // pred_fallthru
      _
    // Predicated region
    $region6: #{lstm_forward.1} parent=1 // pred_check
      _
    $region7: #{lstm_forward.1} parent=1 // pred_check_branch
      %15 = sbr.rel (0) target = $region9
    $region8: #{lstm_forward.1} parent=1 // pred_region
      _
    $region9: #{lstm_forward.1} parent=1 // pred_fallthru
      _
    // Predicated region
    $region10: #{lstm_forward.1} parent=1 // pred_check
      _
    $region11: #{lstm_forward.1} parent=1 // pred_check_branch
      %17 = sbr.rel (0) target = $region13
    $region12: #{lstm_forward.1} parent=1 // pred_region
      %s19 = ssub.s32 512, 512
      %20 = vsyncadd [#allocation3], %s19
      %s21 = sshll.u32 [#allocation2], 4
      %s22 = int_to_ptr.vmem [resolvable:$true] %s21
      %27 = dma.hbm_to_vmem [thread:$0]  %s2, 512, %s22, [#allocation3], 128, 128, 8
    $region13: #{lstm_forward.1} parent=1 // pred_fallthru
      _
    // Predicated region
    $region14: #{lstm_forward.1} parent=1 // pred_check
      _
    $region15: #{lstm_forward.1} parent=1 // pred_check_branch
      %29 = sbr.rel (0) target = $region17
    $region16: #{lstm_forward.1} parent=1 // pred_region
      _
    $region17: #{lstm_forward.1} parent=1 // pred_fallthru
      _
    // Predicated region
    $region18: #{lstm_forward.1} parent=1 // pred_check
      _
    $region19: #{lstm_forward.1} parent=1 // pred_check_branch
      %31 = sbr.rel (0) target = $region21
    $region20: #{lstm_forward.1} parent=1 // pred_region
      _
    $region21: #{lstm_forward.1} parent=1 // pred_fallthru
      _
    // Predicated region
    $region22: #{lstm_forward.1} parent=1 // pred_check
      _
    $region23: #{lstm_forward.1} parent=1 // pred_check_branch
      %33 = sbr.rel (0) target = $region25
    $region24: #{lstm_forward.1} parent=1 // pred_region
      %34 = dma.done [#allocation3], 512
    $region25: #{lstm_forward.1} parent=1 // pred_fallthru
      _
    %v35 = vld [vmem:[%s0] sm:$0xff]
    %v36 = vld [vmem:[%s0 + $0x8] sm:$0xff]
    %v37 = vld [vmem:[%s0 + $0x10] sm:$0xff]
    %v38 = vld [vmem:[%s0 + $0x18] sm:$0xff]
    %v39 = vld [vmem:[%s0 + $0x20] sm:$0xff]
    %v40 = vld [vmem:[%s0 + $0x28] sm:$0xff]
    %v41 = vld [vmem:[%s0 + $0x30] sm:$0xff]
    %v42 = vld [vmem:[%s0 + $0x38] sm:$0xff]
    %v43 = vlaneseq
    %v44 = vand.u32 %v43, 127
    %45 = vset.pattern.permute.xlu0 0
    %46 = vperm.xlu0 %45, %v35
    %v47 = vpop.permute.xlu0 %46
    %48 = vset.pattern.permute.xlu0 0
    %49 = vperm.xlu0 %48, %v36
    %v50 = vpop.permute.xlu0 %49
    %51 = vset.pattern.permute.xlu0 0
    %52 = vperm.xlu0 %51, %v37
    %v53 = vpop.permute.xlu0 %52
    %54 = vset.pattern.permute.xlu0 0
    %55 = vperm.xlu0 %54, %v38
    %v56 = vpop.permute.xlu0 %55
    %57 = vset.pattern.permute.xlu0 0
    %58 = vperm.xlu0 %57, %v39
    %v59 = vpop.permute.xlu0 %58
    %60 = vset.pattern.permute.xlu0 0
    %61 = vperm.xlu0 %60, %v40
    %v62 = vpop.permute.xlu0 %61
    %63 = vset.pattern.permute.xlu0 0
    %64 = vperm.xlu0 %63, %v41
    %v65 = vpop.permute.xlu0 %64
    %66 = vset.pattern.permute.xlu0 0
    %67 = vperm.xlu0 %66, %v42
    %v68 = vpop.permute.xlu0 %67
    %vm69 = vcmp.eq.s32.totalorder %v44, %v47
    %vm70 = vcmp.eq.s32.totalorder %v44, %v50
    %vm71 = vcmp.eq.s32.totalorder %v44, %v53
    %vm72 = vcmp.eq.s32.totalorder %v44, %v56
    %vm73 = vcmp.eq.s32.totalorder %v44, %v59
    %vm74 = vcmp.eq.s32.totalorder %v44, %v62
    %vm75 = vcmp.eq.s32.totalorder %v44, %v65
    %vm76 = vcmp.eq.s32.totalorder %v44, %v68
    %v77 = vsel %vm69, 1, 0
    %v78 = vsel %vm70, 1, 0
    %v79 = vsel %vm71, 1, 0
    %v80 = vsel %vm72, 1, 0
    %v81 = vsel %vm73, 1, 0
    %v82 = vsel %vm74, 1, 0
    %v83 = vsel %vm75, 1, 0
    %v84 = vsel %vm76, 1, 0
    %v85 = vcvt.s32.f32 %v77
    %v86 = vcvt.s32.f32 %v78
    %v87 = vcvt.s32.f32 %v79
    %v88 = vcvt.s32.f32 %v80
    %v89 = vcvt.s32.f32 %v81
    %v90 = vcvt.s32.f32 %v82
    %v91 = vcvt.s32.f32 %v83
    %v92 = vcvt.s32.f32 %v84
    %v93 = vld [vmem:[%s1] sm:$0xff]
    %v94 = vld [vmem:[%s1 + $0x8] sm:$0xff]
    %v95 = vld [vmem:[%s1 + $0x10] sm:$0xff]
    %v96 = vld [vmem:[%s1 + $0x18] sm:$0xff]
    %v97 = vld [vmem:[%s1 + $0x20] sm:$0xff]
    %v98 = vld [vmem:[%s1 + $0x28] sm:$0xff]
    %v99 = vld [vmem:[%s1 + $0x30] sm:$0xff]
    %v100 = vld [vmem:[%s1 + $0x38] sm:$0xff]
    %v101 = vld [vmem:[%s1 + $0x40] sm:$0xff]
    %v102 = vld [vmem:[%s1 + $0x48] sm:$0xff]
    %v103 = vld [vmem:[%s1 + $0x50] sm:$0xff]
    %v104 = vld [vmem:[%s1 + $0x58] sm:$0xff]
    %v105 = vld [vmem:[%s1 + $0x60] sm:$0xff]
    %v106 = vld [vmem:[%s1 + $0x68] sm:$0xff]
    %v107 = vld [vmem:[%s1 + $0x70] sm:$0xff]
    %v108 = vld [vmem:[%s1 + $0x78] sm:$0xff]
    %109 = vmatprep.subr.mxu0 0.0
    %110 = vmatpush1.msra.mxu0 %v108
    %111 = vmatprep.subr.mxu0 0.0
    %112 = vmatpush1.msra.mxu0 %v107
    %113 = vmatprep.subr.mxu0 0.0
    %114 = vmatpush1.msra.mxu0 %v106
    %115 = vmatprep.subr.mxu0 0.0
    %116 = vmatpush1.msra.mxu0 %v105
    %117 = vmatprep.subr.mxu0 0.0
    %118 = vmatpush1.msra.mxu0 %v104
    %119 = vmatprep.subr.mxu0 0.0
    %120 = vmatpush1.msra.mxu0 %v103
    %121 = vmatprep.subr.mxu0 0.0
    %122 = vmatpush1.msra.mxu0 %v102
    %123 = vmatprep.subr.mxu0 0.0
    %124 = vmatpush1.msra.mxu0 %v101
    %125 = vmatprep.subr.mxu0 0.0
    %126 = vmatpush1.msra.mxu0 %v100
    %127 = vmatprep.subr.mxu0 0.0
    %128 = vmatpush1.msra.mxu0 %v99
    %129 = vmatprep.subr.mxu0 0.0
    %130 = vmatpush1.msra.mxu0 %v98
    %131 = vmatprep.subr.mxu0 0.0
    %132 = vmatpush1.msra.mxu0 %v97
    %133 = vmatprep.subr.mxu0 0.0
    %134 = vmatpush1.msra.mxu0 %v96
    %135 = vmatprep.subr.mxu0 0.0
    %136 = vmatpush1.msra.mxu0 %v95
    %137 = vmatprep.subr.mxu0 0.0
    %138 = vmatpush1.msra.mxu0 %v94
    %139 = vmatprep.subr.mxu0 0.0
    %140 = vmatpush1.msra.mxu0 %v93
    %141 = vmatprep.subr.mxu0 0.0
    %142 = vmatpush2.msra.mxu0 0.0
    %143 = vmatprep.subr.mxu0 0.0
    %144 = vmatpush2.msra.mxu0 0.0
    %145 = vmatprep.subr.mxu0 0.0
    %146 = vmatpush2.msra.mxu0 0.0
    %147 = vmatprep.subr.mxu0 0.0
    %148 = vmatpush2.msra.mxu0 0.0
    %149 = vmatprep.subr.mxu0 0.0
    %150 = vmatpush2.msra.mxu0 0.0
    %151 = vmatprep.subr.mxu0 0.0
    %152 = vmatpush2.msra.mxu0 0.0
    %153 = vmatprep.subr.mxu0 0.0
    %154 = vmatpush2.msra.mxu0 0.0
    %155 = vmatprep.subr.mxu0 0.0
    %156 = vmatpush2.msra.mxu0 0.0
    %157 = vmatprep.subr.mxu0 0.0
    %158 = vmatpush2.msra.mxu0 0.0
    %159 = vmatprep.subr.mxu0 0.0
    %160 = vmatpush2.msra.mxu0 0.0
    %161 = vmatprep.subr.mxu0 0.0
    %162 = vmatpush2.msra.mxu0 0.0
    %163 = vmatprep.subr.mxu0 0.0
    %164 = vmatpush2.msra.mxu0 0.0
    %165 = vmatprep.subr.mxu0 0.0
    %166 = vmatpush2.msra.mxu0 0.0
    %167 = vmatprep.subr.mxu0 0.0
    %168 = vmatpush2.msra.mxu0 0.0
    %169 = vmatprep.subr.mxu0 0.0
    %170 = vmatpush2.msra.mxu0 0.0
    %171 = vmatprep.subr.mxu0 0.0
    %172 = vmatpush2.msra.mxu0 0.0
    %173 = vmatprep.mubr.f32.mxu0 0.0
    %174 = vmatmul.mubr.f32.gmra.mxu0 %v85
    %v175 = vpop.f32.mrf.mxu0
    %v176 = vadd.f32 0.0, %v175
    %v177 = vpop.f32.mrf.mxu0
    %178 = vmatprep.mubr.f32.mxu0 0.0
    %179 = vmatmul.mubr.f32.gmra.mxu0 %v86
    %v180 = vpop.f32.mrf.mxu0
    %v181 = vadd.f32 0.0, %v180
    %v182 = vpop.f32.mrf.mxu0
    %183 = vmatprep.mubr.f32.mxu0 0.0
    %184 = vmatmul.mubr.f32.gmra.mxu0 %v87
    %v185 = vpop.f32.mrf.mxu0
    %v186 = vadd.f32 0.0, %v185
    %v187 = vpop.f32.mrf.mxu0
    %188 = vmatprep.mubr.f32.mxu0 0.0
    %189 = vmatmul.mubr.f32.gmra.mxu0 %v88
    %v190 = vpop.f32.mrf.mxu0
    %v191 = vadd.f32 0.0, %v190
    %v192 = vpop.f32.mrf.mxu0
    %193 = vmatprep.mubr.f32.mxu0 0.0
    %194 = vmatmul.mubr.f32.gmra.mxu0 %v89
    %v195 = vpop.f32.mrf.mxu0
    %v196 = vadd.f32 0.0, %v195
    %v197 = vpop.f32.mrf.mxu0
    %198 = vmatprep.mubr.f32.mxu0 0.0
    %199 = vmatmul.mubr.f32.gmra.mxu0 %v90
    %v200 = vpop.f32.mrf.mxu0
    %v201 = vadd.f32 0.0, %v200
    %v202 = vpop.f32.mrf.mxu0
    %203 = vmatprep.mubr.f32.mxu0 0.0
    %204 = vmatmul.mubr.f32.gmra.mxu0 %v91
    %v205 = vpop.f32.mrf.mxu0
    %v206 = vadd.f32 0.0, %v205
    %v207 = vpop.f32.mrf.mxu0
    %208 = vmatprep.mubr.f32.mxu0 0.0
    %209 = vmatmul.mubr.f32.gmra.mxu0 %v92
    %v210 = vpop.f32.mrf.mxu0
    %v211 = vadd.f32 0.0, %v210
    %v212 = vpop.f32.mrf.mxu0
    %213 = vdwg.mxu0
    %v214 = vld [vmem:[#allocation2] sm:$0xff]
    %v215 = vld [vmem:[#allocation2 + $0x8] sm:$0xff]
    %v216 = vld [vmem:[#allocation2 + $0x10] sm:$0xff]
    %v217 = vld [vmem:[#allocation2 + $0x18] sm:$0xff]
    %vm218 = vcmp.ge.s32.totalorder %v44, 64
    %vm219 = vcmp.lt.s32.totalorder %v44, 96
    %vm220 = vmand %vm218, %vm219
    %v221 = vsel %vm220, 1.0, 0.5
    %v222 = vsel %vm220, 0.0, 0.5
    %v223 = vmul.f32 %v176, %v221
    %v224 = vtanh.pop %v223
    %v225 = vmul.f32 %v224, %v221
    %v226 = vadd.f32 %v225, %v222
    %228 = vrot.lane.b32.xlu0 %v226, 64
    %v229 = vpop.permute.xlu0 %228
    %v231 = vmul.f32 %v226, %v229
    %v232 = vtanh.pop %v231
    %234 = vrot.lane.b32.xlu0 %v232, 96
    %v235 = vpop.permute.xlu0 %234
    %v237 = vmul.f32 %v226, %v235
    %239 = vrot.lane.b32.xlu0 %v237, 32
    %v240 = vpop.permute.xlu0 %239
    %vm241 = vcmask 261120
    %v242 = vsel %vm241, %v240, 0
    %244 = vmatprep.subr.mxu0 0.0
    %245 = vmatpush1.msra.mxu0 0.0
    %246 = vmatprep.subr.mxu0 0.0
    %247 = vmatpush1.msra.mxu0 0.0
    %248 = vmatprep.subr.mxu0 0.0
    %249 = vmatpush1.msra.mxu0 0.0
    %250 = vmatprep.subr.mxu0 0.0
    %251 = vmatpush1.msra.mxu0 0.0
    %252 = vmatprep.subr.mxu0 0.0
    %253 = vmatpush1.msra.mxu0 0.0
    %254 = vmatprep.subr.mxu0 0.0
    %255 = vmatpush1.msra.mxu0 0.0
    %256 = vmatprep.subr.mxu0 0.0
    %257 = vmatpush1.msra.mxu0 0.0
    %258 = vmatprep.subr.mxu0 0.0
    %259 = vmatpush1.msra.mxu0 0.0
    %260 = vmatprep.subr.mxu0 0.0
    %261 = vmatpush1.msra.mxu0 0.0
    %262 = vmatprep.subr.mxu0 0.0
    %263 = vmatpush1.msra.mxu0 0.0
    %264 = vmatprep.subr.mxu0 0.0
    %265 = vmatpush1.msra.mxu0 0.0
    %266 = vmatprep.subr.mxu0 0.0
    %267 = vmatpush1.msra.mxu0 0.0
    %268 = vmatprep.subr.mxu0 0.0
    %269 = vmatpush1.msra.mxu0 %v217
    %270 = vmatprep.subr.mxu0 0.0
    %271 = vmatpush1.msra.mxu0 %v216
    %272 = vmatprep.subr.mxu0 0.0
    %273 = vmatpush1.msra.mxu0 %v215
    %274 = vmatprep.subr.mxu0 0.0
    %275 = vmatpush1.msra.mxu0 %v214
    %276 = vmatprep.subr.mxu0 0.0
    %277 = vmatpush2.msra.mxu0 0.0
    %278 = vmatprep.subr.mxu0 0.0
    %279 = vmatpush2.msra.mxu0 0.0
    %280 = vmatprep.subr.mxu0 0.0
    %281 = vmatpush2.msra.mxu0 0.0
    %282 = vmatprep.subr.mxu0 0.0
    %283 = vmatpush2.msra.mxu0 0.0
    %284 = vmatprep.subr.mxu0 0.0
    %285 = vmatpush2.msra.mxu0 0.0
    %286 = vmatprep.subr.mxu0 0.0
    %287 = vmatpush2.msra.mxu0 0.0
    %288 = vmatprep.subr.mxu0 0.0
    %289 = vmatpush2.msra.mxu0 0.0
    %290 = vmatprep.subr.mxu0 0.0
    %291 = vmatpush2.msra.mxu0 0.0
    %292 = vmatprep.subr.mxu0 0.0
    %293 = vmatpush2.msra.mxu0 0.0
    %294 = vmatprep.subr.mxu0 0.0
    %295 = vmatpush2.msra.mxu0 0.0
    %296 = vmatprep.subr.mxu0 0.0
    %297 = vmatpush2.msra.mxu0 0.0
    %298 = vmatprep.subr.mxu0 0.0
    %299 = vmatpush2.msra.mxu0 0.0
    %300 = vmatprep.subr.mxu0 0.0
    %301 = vmatpush2.msra.mxu0 0.0
    %302 = vmatprep.subr.mxu0 0.0
    %303 = vmatpush2.msra.mxu0 0.0
    %304 = vmatprep.subr.mxu0 0.0
    %305 = vmatpush2.msra.mxu0 0.0
    %306 = vmatprep.subr.mxu0 0.0
    %307 = vmatpush2.msra.mxu0 0.0
    %308 = vmatprep.mubr.f32.mxu0 0.0
    %309 = vmatmul.mubr.f32.gmra.mxu0 %v242
    %v310 = vpop.f32.mrf.mxu0
    %v311 = vadd.f32 0.0, %v310
    %v312 = vpop.f32.mrf.mxu0
    %313 = vdwg.mxu0
    %v314 = vadd.f32 %v181, %v311
    %v315 = vmul.f32 %v314, %v221
    %v316 = vtanh.pop %v315
    %v317 = vmul.f32 %v316, %v221
    %v318 = vadd.f32 %v317, %v222
    %320 = vrot.lane.b32.xlu0 %v231, 32
    %v321 = vpop.permute.xlu0 %320
    %v323 = vmul.f32 %v318, %v321
    %325 = vrot.lane.b32.xlu0 %v318, 64
    %v326 = vpop.permute.xlu0 %325
    %v328 = vmul.f32 %v318, %v326
    %330 = vrot.lane.b32.xlu0 %v328, 32
    %v331 = vpop.permute.xlu0 %330
    %v333 = vadd.f32 %v323, %v331
    %v334 = vtanh.pop %v333
    %336 = vrot.lane.b32.xlu0 %v334, 64
    %v337 = vpop.permute.xlu0 %336
    %v339 = vmul.f32 %v318, %v337
    %341 = vrot.lane.b32.xlu0 %v339, 32
    %v342 = vpop.permute.xlu0 %341
    %v343 = vsel %vm241, %v342, 0
    %345 = vmatprep.subr.mxu0 0.0
    %346 = vmatpush1.msra.mxu0 0.0
    %347 = vmatprep.subr.mxu0 0.0
    %348 = vmatpush1.msra.mxu0 0.0
    %349 = vmatprep.subr.mxu0 0.0
    %350 = vmatpush1.msra.mxu0 0.0
    %351 = vmatprep.subr.mxu0 0.0
    %352 = vmatpush1.msra.mxu0 0.0
    %353 = vmatprep.subr.mxu0 0.0
    %354 = vmatpush1.msra.mxu0 0.0
    %355 = vmatprep.subr.mxu0 0.0
    %356 = vmatpush1.msra.mxu0 0.0
    %357 = vmatprep.subr.mxu0 0.0
    %358 = vmatpush1.msra.mxu0 0.0
    %359 = vmatprep.subr.mxu0 0.0
    %360 = vmatpush1.msra.mxu0 0.0
    %361 = vmatprep.subr.mxu0 0.0
    %362 = vmatpush1.msra.mxu0 0.0
    %363 = vmatprep.subr.mxu0 0.0
    %364 = vmatpush1.msra.mxu0 0.0
    %365 = vmatprep.subr.mxu0 0.0
    %366 = vmatpush1.msra.mxu0 0.0
    %367 = vmatprep.subr.mxu0 0.0
    %368 = vmatpush1.msra.mxu0 0.0
    %369 = vmatprep.subr.mxu0 0.0
    %370 = vmatpush1.msra.mxu0 %v217
    %371 = vmatprep.subr.mxu0 0.0
    %372 = vmatpush1.msra.mxu0 %v216
    %373 = vmatprep.subr.mxu0 0.0
    %374 = vmatpush1.msra.mxu0 %v215
    %375 = vmatprep.subr.mxu0 0.0
    %376 = vmatpush1.msra.mxu0 %v214
    %377 = vmatprep.subr.mxu0 0.0
    %378 = vmatpush2.msra.mxu0 0.0
    %379 = vmatprep.subr.mxu0 0.0
    %380 = vmatpush2.msra.mxu0 0.0
    %381 = vmatprep.subr.mxu0 0.0
    %382 = vmatpush2.msra.mxu0 0.0
    %383 = vmatprep.subr.mxu0 0.0
    %384 = vmatpush2.msra.mxu0 0.0
    %385 = vmatprep.subr.mxu0 0.0
    %386 = vmatpush2.msra.mxu0 0.0
    %387 = vmatprep.subr.mxu0 0.0
    %388 = vmatpush2.msra.mxu0 0.0
    %389 = vmatprep.subr.mxu0 0.0
    %390 = vmatpush2.msra.mxu0 0.0
    %391 = vmatprep.subr.mxu0 0.0
    %392 = vmatpush2.msra.mxu0 0.0
    %393 = vmatprep.subr.mxu0 0.0
    %394 = vmatpush2.msra.mxu0 0.0
    %395 = vmatprep.subr.mxu0 0.0
    %396 = vmatpush2.msra.mxu0 0.0
    %397 = vmatprep.subr.mxu0 0.0
    %398 = vmatpush2.msra.mxu0 0.0
    %399 = vmatprep.subr.mxu0 0.0
    %400 = vmatpush2.msra.mxu0 0.0
    %401 = vmatprep.subr.mxu0 0.0
    %402 = vmatpush2.msra.mxu0 0.0
    %403 = vmatprep.subr.mxu0 0.0
    %404 = vmatpush2.msra.mxu0 0.0
    %405 = vmatprep.subr.mxu0 0.0
    %406 = vmatpush2.msra.mxu0 0.0
    %407 = vmatprep.subr.mxu0 0.0
    %408 = vmatpush2.msra.mxu0 0.0
    %409 = vmatprep.mubr.f32.mxu0 0.0
    %410 = vmatmul.mubr.f32.gmra.mxu0 %v343
    %v411 = vpop.f32.mrf.mxu0
    %v412 = vadd.f32 0.0, %v411
    %v413 = vpop.f32.mrf.mxu0
    %414 = vdwg.mxu0
    %v415 = vadd.f32 %v186, %v412
    %v416 = vmul.f32 %v415, %v221
    %v417 = vtanh.pop %v416
    %v418 = vmul.f32 %v417, %v221
    %v419 = vadd.f32 %v418, %v222
    %v420 = vmul.f32 %v419, %v333
    %422 = vrot.lane.b32.xlu0 %v419, 64
    %v423 = vpop.permute.xlu0 %422
    %v425 = vmul.f32 %v419, %v423
    %427 = vrot.lane.b32.xlu0 %v425, 32
    %v428 = vpop.permute.xlu0 %427
    %v430 = vadd.f32 %v420, %v428
    %v431 = vtanh.pop %v430
    %433 = vrot.lane.b32.xlu0 %v431, 64
    %v434 = vpop.permute.xlu0 %433
    %v436 = vmul.f32 %v419, %v434
    %438 = vrot.lane.b32.xlu0 %v436, 32
    %v439 = vpop.permute.xlu0 %438
    %v440 = vsel %vm241, %v439, 0
    %442 = vmatprep.subr.mxu0 0.0
    %443 = vmatpush1.msra.mxu0 0.0
    %444 = vmatprep.subr.mxu0 0.0
    %445 = vmatpush1.msra.mxu0 0.0
    %446 = vmatprep.subr.mxu0 0.0
    %447 = vmatpush1.msra.mxu0 0.0
    %448 = vmatprep.subr.mxu0 0.0
    %449 = vmatpush1.msra.mxu0 0.0
    %450 = vmatprep.subr.mxu0 0.0
    %451 = vmatpush1.msra.mxu0 0.0
    %452 = vmatprep.subr.mxu0 0.0
    %453 = vmatpush1.msra.mxu0 0.0
    %454 = vmatprep.subr.mxu0 0.0
    %455 = vmatpush1.msra.mxu0 0.0
    %456 = vmatprep.subr.mxu0 0.0
    %457 = vmatpush1.msra.mxu0 0.0
    %458 = vmatprep.subr.mxu0 0.0
    %459 = vmatpush1.msra.mxu0 0.0
    %460 = vmatprep.subr.mxu0 0.0
    %461 = vmatpush1.msra.mxu0 0.0
    %462 = vmatprep.subr.mxu0 0.0
    %463 = vmatpush1.msra.mxu0 0.0
    %464 = vmatprep.subr.mxu0 0.0
    %465 = vmatpush1.msra.mxu0 0.0
    %466 = vmatprep.subr.mxu0 0.0
    %467 = vmatpush1.msra.mxu0 %v217
    %468 = vmatprep.subr.mxu0 0.0
    %469 = vmatpush1.msra.mxu0 %v216
    %470 = vmatprep.subr.mxu0 0.0
    %471 = vmatpush1.msra.mxu0 %v215
    %472 = vmatprep.subr.mxu0 0.0
    %473 = vmatpush1.msra.mxu0 %v214
    %474 = vmatprep.subr.mxu0 0.0
    %475 = vmatpush2.msra.mxu0 0.0
    %476 = vmatprep.subr.mxu0 0.0
    %477 = vmatpush2.msra.mxu0 0.0
    %478 = vmatprep.subr.mxu0 0.0
    %479 = vmatpush2.msra.mxu0 0.0
    %480 = vmatprep.subr.mxu0 0.0
    %481 = vmatpush2.msra.mxu0 0.0
    %482 = vmatprep.subr.mxu0 0.0
    %483 = vmatpush2.msra.mxu0 0.0
    %484 = vmatprep.subr.mxu0 0.0
    %485 = vmatpush2.msra.mxu0 0.0
    %486 = vmatprep.subr.mxu0 0.0
    %487 = vmatpush2.msra.mxu0 0.0
    %488 = vmatprep.subr.mxu0 0.0
    %489 = vmatpush2.msra.mxu0 0.0
    %490 = vmatprep.subr.mxu0 0.0
    %491 = vmatpush2.msra.mxu0 0.0
    %492 = vmatprep.subr.mxu0 0.0
    %493 = vmatpush2.msra.mxu0 0.0
    %494 = vmatprep.subr.mxu0 0.0
    %495 = vmatpush2.msra.mxu0 0.0
    %496 = vmatprep.subr.mxu0 0.0
    %497 = vmatpush2.msra.mxu0 0.0
    %498 = vmatprep.subr.mxu0 0.0
    %499 = vmatpush2.msra.mxu0 0.0
    %500 = vmatprep.subr.mxu0 0.0
    %501 = vmatpush2.msra.mxu0 0.0
    %502 = vmatprep.subr.mxu0 0.0
    %503 = vmatpush2.msra.mxu0 0.0
    %504 = vmatprep.subr.mxu0 0.0
    %505 = vmatpush2.msra.mxu0 0.0
    %506 = vmatprep.mubr.f32.mxu0 0.0
    %507 = vmatmul.mubr.f32.gmra.mxu0 %v440
    %v508 = vpop.f32.mrf.mxu0
    %v509 = vadd.f32 0.0, %v508
    %v510 = vpop.f32.mrf.mxu0
    %511 = vdwg.mxu0
    %v512 = vadd.f32 %v191, %v509
    %v513 = vmul.f32 %v512, %v221
    %v514 = vtanh.pop %v513
    %v515 = vmul.f32 %v514, %v221
    %v516 = vadd.f32 %v515, %v222
    %v517 = vmul.f32 %v516, %v430
    %519 = vrot.lane.b32.xlu0 %v516, 64
    %v520 = vpop.permute.xlu0 %519
    %v522 = vmul.f32 %v516, %v520
    %524 = vrot.lane.b32.xlu0 %v522, 32
    %v525 = vpop.permute.xlu0 %524
    %v527 = vadd.f32 %v517, %v525
    %v528 = vtanh.pop %v527
    %530 = vrot.lane.b32.xlu0 %v528, 64
    %v531 = vpop.permute.xlu0 %530
    %v533 = vmul.f32 %v516, %v531
    %535 = vrot.lane.b32.xlu0 %v533, 32
    %v536 = vpop.permute.xlu0 %535
    %v537 = vsel %vm241, %v536, 0
    %539 = vmatprep.subr.mxu0 0.0
    %540 = vmatpush1.msra.mxu0 0.0
    %541 = vmatprep.subr.mxu0 0.0
    %542 = vmatpush1.msra.mxu0 0.0
    %543 = vmatprep.subr.mxu0 0.0
    %544 = vmatpush1.msra.mxu0 0.0
    %545 = vmatprep.subr.mxu0 0.0
    %546 = vmatpush1.msra.mxu0 0.0
    %547 = vmatprep.subr.mxu0 0.0
    %548 = vmatpush1.msra.mxu0 0.0
    %549 = vmatprep.subr.mxu0 0.0
    %550 = vmatpush1.msra.mxu0 0.0
    %551 = vmatprep.subr.mxu0 0.0
    %552 = vmatpush1.msra.mxu0 0.0
    %553 = vmatprep.subr.mxu0 0.0
    %554 = vmatpush1.msra.mxu0 0.0
    %555 = vmatprep.subr.mxu0 0.0
    %556 = vmatpush1.msra.mxu0 0.0
    %557 = vmatprep.subr.mxu0 0.0
    %558 = vmatpush1.msra.mxu0 0.0
    %559 = vmatprep.subr.mxu0 0.0
    %560 = vmatpush1.msra.mxu0 0.0
    %561 = vmatprep.subr.mxu0 0.0
    %562 = vmatpush1.msra.mxu0 0.0
    %563 = vmatprep.subr.mxu0 0.0
    %564 = vmatpush1.msra.mxu0 %v217
    %565 = vmatprep.subr.mxu0 0.0
    %566 = vmatpush1.msra.mxu0 %v216
    %567 = vmatprep.subr.mxu0 0.0
    %568 = vmatpush1.msra.mxu0 %v215
    %569 = vmatprep.subr.mxu0 0.0
    %570 = vmatpush1.msra.mxu0 %v214
    %571 = vmatprep.subr.mxu0 0.0
    %572 = vmatpush2.msra.mxu0 0.0
    %573 = vmatprep.subr.mxu0 0.0
    %574 = vmatpush2.msra.mxu0 0.0
    %575 = vmatprep.subr.mxu0 0.0
    %576 = vmatpush2.msra.mxu0 0.0
    %577 = vmatprep.subr.mxu0 0.0
    %578 = vmatpush2.msra.mxu0 0.0
    %579 = vmatprep.subr.mxu0 0.0
    %580 = vmatpush2.msra.mxu0 0.0
    %581 = vmatprep.subr.mxu0 0.0
    %582 = vmatpush2.msra.mxu0 0.0
    %583 = vmatprep.subr.mxu0 0.0
    %584 = vmatpush2.msra.mxu0 0.0
    %585 = vmatprep.subr.mxu0 0.0
    %586 = vmatpush2.msra.mxu0 0.0
    %587 = vmatprep.subr.mxu0 0.0
    %588 = vmatpush2.msra.mxu0 0.0
    %589 = vmatprep.subr.mxu0 0.0
    %590 = vmatpush2.msra.mxu0 0.0
    %591 = vmatprep.subr.mxu0 0.0
    %592 = vmatpush2.msra.mxu0 0.0
    %593 = vmatprep.subr.mxu0 0.0
    %594 = vmatpush2.msra.mxu0 0.0
    %595 = vmatprep.subr.mxu0 0.0
    %596 = vmatpush2.msra.mxu0 0.0
    %597 = vmatprep.subr.mxu0 0.0
    %598 = vmatpush2.msra.mxu0 0.0
    %599 = vmatprep.subr.mxu0 0.0
    %600 = vmatpush2.msra.mxu0 0.0
    %601 = vmatprep.subr.mxu0 0.0
    %602 = vmatpush2.msra.mxu0 0.0
    %603 = vmatprep.mubr.f32.mxu0 0.0
    %604 = vmatmul.mubr.f32.gmra.mxu0 %v537
    %v605 = vpop.f32.mrf.mxu0
    %v606 = vadd.f32 0.0, %v605
    %v607 = vpop.f32.mrf.mxu0
    %608 = vdwg.mxu0
    %v609 = vadd.f32 %v196, %v606
    %v610 = vmul.f32 %v609, %v221
    %v611 = vtanh.pop %v610
    %v612 = vmul.f32 %v611, %v221
    %v613 = vadd.f32 %v612, %v222
    %v614 = vmul.f32 %v613, %v527
    %616 = vrot.lane.b32.xlu0 %v613, 64
    %v617 = vpop.permute.xlu0 %616
    %v619 = vmul.f32 %v613, %v617
    %621 = vrot.lane.b32.xlu0 %v619, 32
    %v622 = vpop.permute.xlu0 %621
    %v624 = vadd.f32 %v614, %v622
    %v625 = vtanh.pop %v624
    %627 = vrot.lane.b32.xlu0 %v625, 64
    %v628 = vpop.permute.xlu0 %627
    %v630 = vmul.f32 %v613, %v628
    %632 = vrot.lane.b32.xlu0 %v630, 32
    %v633 = vpop.permute.xlu0 %632
    %v634 = vsel %vm241, %v633, 0
    %636 = vmatprep.subr.mxu0 0.0
    %637 = vmatpush1.msra.mxu0 0.0
    %638 = vmatprep.subr.mxu0 0.0
    %639 = vmatpush1.msra.mxu0 0.0
    %640 = vmatprep.subr.mxu0 0.0
    %641 = vmatpush1.msra.mxu0 0.0
    %642 = vmatprep.subr.mxu0 0.0
    %643 = vmatpush1.msra.mxu0 0.0
    %644 = vmatprep.subr.mxu0 0.0
    %645 = vmatpush1.msra.mxu0 0.0
    %646 = vmatprep.subr.mxu0 0.0
    %647 = vmatpush1.msra.mxu0 0.0
    %648 = vmatprep.subr.mxu0 0.0
    %649 = vmatpush1.msra.mxu0 0.0
    %650 = vmatprep.subr.mxu0 0.0
    %651 = vmatpush1.msra.mxu0 0.0
    %652 = vmatprep.subr.mxu0 0.0
    %653 = vmatpush1.msra.mxu0 0.0
    %654 = vmatprep.subr.mxu0 0.0
    %655 = vmatpush1.msra.mxu0 0.0
    %656 = vmatprep.subr.mxu0 0.0
    %657 = vmatpush1.msra.mxu0 0.0
    %658 = vmatprep.subr.mxu0 0.0
    %659 = vmatpush1.msra.mxu0 0.0
    %660 = vmatprep.subr.mxu0 0.0
    %661 = vmatpush1.msra.mxu0 %v217
    %662 = vmatprep.subr.mxu0 0.0
    %663 = vmatpush1.msra.mxu0 %v216
    %664 = vmatprep.subr.mxu0 0.0
    %665 = vmatpush1.msra.mxu0 %v215
    %666 = vmatprep.subr.mxu0 0.0
    %667 = vmatpush1.msra.mxu0 %v214
    %668 = vmatprep.subr.mxu0 0.0
    %669 = vmatpush2.msra.mxu0 0.0
    %670 = vmatprep.subr.mxu0 0.0
    %671 = vmatpush2.msra.mxu0 0.0
    %672 = vmatprep.subr.mxu0 0.0
    %673 = vmatpush2.msra.mxu0 0.0
    %674 = vmatprep.subr.mxu0 0.0
    %675 = vmatpush2.msra.mxu0 0.0
    %676 = vmatprep.subr.mxu0 0.0
    %677 = vmatpush2.msra.mxu0 0.0
    %678 = vmatprep.subr.mxu0 0.0
    %679 = vmatpush2.msra.mxu0 0.0
    %680 = vmatprep.subr.mxu0 0.0
    %681 = vmatpush2.msra.mxu0 0.0
    %682 = vmatprep.subr.mxu0 0.0
    %683 = vmatpush2.msra.mxu0 0.0
    %684 = vmatprep.subr.mxu0 0.0
    %685 = vmatpush2.msra.mxu0 0.0
    %686 = vmatprep.subr.mxu0 0.0
    %687 = vmatpush2.msra.mxu0 0.0
    %688 = vmatprep.subr.mxu0 0.0
    %689 = vmatpush2.msra.mxu0 0.0
    %690 = vmatprep.subr.mxu0 0.0
    %691 = vmatpush2.msra.mxu0 0.0
    %692 = vmatprep.subr.mxu0 0.0
    %693 = vmatpush2.msra.mxu0 0.0
    %694 = vmatprep.subr.mxu0 0.0
    %695 = vmatpush2.msra.mxu0 0.0
    %696 = vmatprep.subr.mxu0 0.0
    %697 = vmatpush2.msra.mxu0 0.0
    %698 = vmatprep.subr.mxu0 0.0
    %699 = vmatpush2.msra.mxu0 0.0
    %700 = vmatprep.mubr.f32.mxu0 0.0
    %701 = vmatmul.mubr.f32.gmra.mxu0 %v634
    %v702 = vpop.f32.mrf.mxu0
    %v703 = vadd.f32 0.0, %v702
    %v704 = vpop.f32.mrf.mxu0
    %705 = vdwg.mxu0
    %v706 = vadd.f32 %v201, %v703
    %v707 = vmul.f32 %v706, %v221
    %v708 = vtanh.pop %v707
    %v709 = vmul.f32 %v708, %v221
    %v710 = vadd.f32 %v709, %v222
    %v711 = vmul.f32 %v710, %v624
    %713 = vrot.lane.b32.xlu0 %v710, 64
    %v714 = vpop.permute.xlu0 %713
    %v716 = vmul.f32 %v710, %v714
    %718 = vrot.lane.b32.xlu0 %v716, 32
    %v719 = vpop.permute.xlu0 %718
    %v721 = vadd.f32 %v711, %v719
    %v722 = vtanh.pop %v721
    %724 = vrot.lane.b32.xlu0 %v722, 64
    %v725 = vpop.permute.xlu0 %724
    %v727 = vmul.f32 %v710, %v725
    %729 = vrot.lane.b32.xlu0 %v727, 32
    %v730 = vpop.permute.xlu0 %729
    %v731 = vsel %vm241, %v730, 0
    %733 = vmatprep.subr.mxu0 0.0
    %734 = vmatpush1.msra.mxu0 0.0
    %735 = vmatprep.subr.mxu0 0.0
    %736 = vmatpush1.msra.mxu0 0.0
    %737 = vmatprep.subr.mxu0 0.0
    %738 = vmatpush1.msra.mxu0 0.0
    %739 = vmatprep.subr.mxu0 0.0
    %740 = vmatpush1.msra.mxu0 0.0
    %741 = vmatprep.subr.mxu0 0.0
    %742 = vmatpush1.msra.mxu0 0.0
    %743 = vmatprep.subr.mxu0 0.0
    %744 = vmatpush1.msra.mxu0 0.0
    %745 = vmatprep.subr.mxu0 0.0
    %746 = vmatpush1.msra.mxu0 0.0
    %747 = vmatprep.subr.mxu0 0.0
    %748 = vmatpush1.msra.mxu0 0.0
    %749 = vmatprep.subr.mxu0 0.0
    %750 = vmatpush1.msra.mxu0 0.0
    %751 = vmatprep.subr.mxu0 0.0
    %752 = vmatpush1.msra.mxu0 0.0
    %753 = vmatprep.subr.mxu0 0.0
    %754 = vmatpush1.msra.mxu0 0.0
    %755 = vmatprep.subr.mxu0 0.0
    %756 = vmatpush1.msra.mxu0 0.0
    %757 = vmatprep.subr.mxu0 0.0
    %758 = vmatpush1.msra.mxu0 %v217
    %759 = vmatprep.subr.mxu0 0.0
    %760 = vmatpush1.msra.mxu0 %v216
    %761 = vmatprep.subr.mxu0 0.0
    %762 = vmatpush1.msra.mxu0 %v215
    %763 = vmatprep.subr.mxu0 0.0
    %764 = vmatpush1.msra.mxu0 %v214
    %765 = vmatprep.subr.mxu0 0.0
    %766 = vmatpush2.msra.mxu0 0.0
    %767 = vmatprep.subr.mxu0 0.0
    %768 = vmatpush2.msra.mxu0 0.0
    %769 = vmatprep.subr.mxu0 0.0
    %770 = vmatpush2.msra.mxu0 0.0
    %771 = vmatprep.subr.mxu0 0.0
    %772 = vmatpush2.msra.mxu0 0.0
    %773 = vmatprep.subr.mxu0 0.0
    %774 = vmatpush2.msra.mxu0 0.0
    %775 = vmatprep.subr.mxu0 0.0
    %776 = vmatpush2.msra.mxu0 0.0
    %777 = vmatprep.subr.mxu0 0.0
    %778 = vmatpush2.msra.mxu0 0.0
    %779 = vmatprep.subr.mxu0 0.0
    %780 = vmatpush2.msra.mxu0 0.0
    %781 = vmatprep.subr.mxu0 0.0
    %782 = vmatpush2.msra.mxu0 0.0
    %783 = vmatprep.subr.mxu0 0.0
    %784 = vmatpush2.msra.mxu0 0.0
    %785 = vmatprep.subr.mxu0 0.0
    %786 = vmatpush2.msra.mxu0 0.0
    %787 = vmatprep.subr.mxu0 0.0
    %788 = vmatpush2.msra.mxu0 0.0
    %789 = vmatprep.subr.mxu0 0.0
    %790 = vmatpush2.msra.mxu0 0.0
    %791 = vmatprep.subr.mxu0 0.0
    %792 = vmatpush2.msra.mxu0 0.0
    %793 = vmatprep.subr.mxu0 0.0
    %794 = vmatpush2.msra.mxu0 0.0
    %795 = vmatprep.subr.mxu0 0.0
    %796 = vmatpush2.msra.mxu0 0.0
    %797 = vmatprep.mubr.f32.mxu0 0.0
    %798 = vmatmul.mubr.f32.gmra.mxu0 %v731
    %v799 = vpop.f32.mrf.mxu0
    %v800 = vadd.f32 0.0, %v799
    %v801 = vpop.f32.mrf.mxu0
    %802 = vdwg.mxu0
    %v803 = vadd.f32 %v206, %v800
    %v804 = vmul.f32 %v803, %v221
    %v805 = vtanh.pop %v804
    %v806 = vmul.f32 %v805, %v221
    %v807 = vadd.f32 %v806, %v222
    %v808 = vmul.f32 %v807, %v721
    %810 = vrot.lane.b32.xlu0 %v807, 64
    %v811 = vpop.permute.xlu0 %810
    %v813 = vmul.f32 %v807, %v811
    %815 = vrot.lane.b32.xlu0 %v813, 32
    %v816 = vpop.permute.xlu0 %815
    %v818 = vadd.f32 %v808, %v816
    %v819 = vtanh.pop %v818
    %821 = vrot.lane.b32.xlu0 %v819, 64
    %v822 = vpop.permute.xlu0 %821
    %v824 = vmul.f32 %v807, %v822
    %826 = vrot.lane.b32.xlu0 %v824, 32
    %v827 = vpop.permute.xlu0 %826
    %v828 = vsel %vm241, %v827, 0
    %830 = vmatprep.subr.mxu0 0.0
    %831 = vmatpush1.msra.mxu0 0.0
    %832 = vmatprep.subr.mxu0 0.0
    %833 = vmatpush1.msra.mxu0 0.0
    %834 = vmatprep.subr.mxu0 0.0
    %835 = vmatpush1.msra.mxu0 0.0
    %836 = vmatprep.subr.mxu0 0.0
    %837 = vmatpush1.msra.mxu0 0.0
    %838 = vmatprep.subr.mxu0 0.0
    %839 = vmatpush1.msra.mxu0 0.0
    %840 = vmatprep.subr.mxu0 0.0
    %841 = vmatpush1.msra.mxu0 0.0
    %842 = vmatprep.subr.mxu0 0.0
    %843 = vmatpush1.msra.mxu0 0.0
    %844 = vmatprep.subr.mxu0 0.0
    %845 = vmatpush1.msra.mxu0 0.0
    %846 = vmatprep.subr.mxu0 0.0
    %847 = vmatpush1.msra.mxu0 0.0
    %848 = vmatprep.subr.mxu0 0.0
    %849 = vmatpush1.msra.mxu0 0.0
    %850 = vmatprep.subr.mxu0 0.0
    %851 = vmatpush1.msra.mxu0 0.0
    %852 = vmatprep.subr.mxu0 0.0
    %853 = vmatpush1.msra.mxu0 0.0
    %854 = vmatprep.subr.mxu0 0.0
    %855 = vmatpush1.msra.mxu0 %v217
    %856 = vmatprep.subr.mxu0 0.0
    %857 = vmatpush1.msra.mxu0 %v216
    %858 = vmatprep.subr.mxu0 0.0
    %859 = vmatpush1.msra.mxu0 %v215
    %860 = vmatprep.subr.mxu0 0.0
    %861 = vmatpush1.msra.mxu0 %v214
    %862 = vmatprep.subr.mxu0 0.0
    %863 = vmatpush2.msra.mxu0 0.0
    %864 = vmatprep.subr.mxu0 0.0
    %865 = vmatpush2.msra.mxu0 0.0
    %866 = vmatprep.subr.mxu0 0.0
    %867 = vmatpush2.msra.mxu0 0.0
    %868 = vmatprep.subr.mxu0 0.0
    %869 = vmatpush2.msra.mxu0 0.0
    %870 = vmatprep.subr.mxu0 0.0
    %871 = vmatpush2.msra.mxu0 0.0
    %872 = vmatprep.subr.mxu0 0.0
    %873 = vmatpush2.msra.mxu0 0.0
    %874 = vmatprep.subr.mxu0 0.0
    %875 = vmatpush2.msra.mxu0 0.0
    %876 = vmatprep.subr.mxu0 0.0
    %877 = vmatpush2.msra.mxu0 0.0
    %878 = vmatprep.subr.mxu0 0.0
    %879 = vmatpush2.msra.mxu0 0.0
    %880 = vmatprep.subr.mxu0 0.0
    %881 = vmatpush2.msra.mxu0 0.0
    %882 = vmatprep.subr.mxu0 0.0
    %883 = vmatpush2.msra.mxu0 0.0
    %884 = vmatprep.subr.mxu0 0.0
    %885 = vmatpush2.msra.mxu0 0.0
    %886 = vmatprep.subr.mxu0 0.0
    %887 = vmatpush2.msra.mxu0 0.0
    %888 = vmatprep.subr.mxu0 0.0
    %889 = vmatpush2.msra.mxu0 0.0
    %890 = vmatprep.subr.mxu0 0.0
    %891 = vmatpush2.msra.mxu0 0.0
    %892 = vmatprep.subr.mxu0 0.0
    %893 = vmatpush2.msra.mxu0 0.0
    %894 = vmatprep.mubr.f32.mxu0 0.0
    %895 = vmatmul.mubr.f32.gmra.mxu0 %v828
    %v896 = vpop.f32.mrf.mxu0
    %v897 = vadd.f32 0.0, %v896
    %v898 = vpop.f32.mrf.mxu0
    %899 = vdwg.mxu0
    %v900 = vadd.f32 %v211, %v897
    %v901 = vmul.f32 %v900, %v221
    %v902 = vtanh.pop %v901
    %v903 = vmul.f32 %v902, %v221
    %v904 = vadd.f32 %v903, %v222
    %v905 = vmul.f32 %v904, %v818
    %907 = vrot.lane.b32.xlu0 %v904, 64
    %v908 = vpop.permute.xlu0 %907
    %v910 = vmul.f32 %v904, %v908
    %912 = vrot.lane.b32.xlu0 %v910, 32
    %v913 = vpop.permute.xlu0 %912
    %v915 = vadd.f32 %v905, %v913
    %v916 = vtanh.pop %v915
    %918 = vrot.lane.b32.xlu0 %v916, 64
    %v919 = vpop.permute.xlu0 %918
    %v921 = vmul.f32 %v904, %v919
    %v922 = vld [vmem:[%s3] sm:$0xff]
    %v923 = vld [vmem:[%s3 + $0x8] sm:$0xff]
    %v924 = vld [vmem:[%s3 + $0x10] sm:$0xff]
    %v925 = vld [vmem:[%s3 + $0x18] sm:$0xff]
    %v926 = vld [vmem:[%s4] sm:$0x1]
    %v928 = vlaneseq
    %v929 = vshrl.u32 %v928, 7
    %v930 = vsub.s32 0, %v929
    %v931 = vrot.slane %v926, %v930
    %934 = vrot.lane.b32.xlu0 %v921, 32
    %v935 = vpop.permute.xlu0 %934
    %v936 = vsel %vm241, %v935, 0
    %938 = vmatprep.subr.mxu0 0.0
    %939 = vmatpush1.msra.mxu0 0.0
    %940 = vmatprep.subr.mxu0 0.0
    %941 = vmatpush1.msra.mxu0 0.0
    %942 = vmatprep.subr.mxu0 0.0
    %943 = vmatpush1.msra.mxu0 0.0
    %944 = vmatprep.subr.mxu0 0.0
    %945 = vmatpush1.msra.mxu0 0.0
    %946 = vmatprep.subr.mxu0 0.0
    %947 = vmatpush1.msra.mxu0 0.0
    %948 = vmatprep.subr.mxu0 0.0
    %949 = vmatpush1.msra.mxu0 0.0
    %950 = vmatprep.subr.mxu0 0.0
    %951 = vmatpush1.msra.mxu0 0.0
    %952 = vmatprep.subr.mxu0 0.0
    %953 = vmatpush1.msra.mxu0 0.0
    %954 = vmatprep.subr.mxu0 0.0
    %955 = vmatpush1.msra.mxu0 0.0
    %956 = vmatprep.subr.mxu0 0.0
    %957 = vmatpush1.msra.mxu0 0.0
    %958 = vmatprep.subr.mxu0 0.0
    %959 = vmatpush1.msra.mxu0 0.0
    %960 = vmatprep.subr.mxu0 0.0
    %961 = vmatpush1.msra.mxu0 0.0
    %962 = vmatprep.subr.mxu0 0.0
    %963 = vmatpush1.msra.mxu0 %v925
    %964 = vmatprep.subr.mxu0 0.0
    %965 = vmatpush1.msra.mxu0 %v924
    %966 = vmatprep.subr.mxu0 0.0
    %967 = vmatpush1.msra.mxu0 %v923
    %968 = vmatprep.subr.mxu0 0.0
    %969 = vmatpush1.msra.mxu0 %v922
    %970 = vmatprep.subr.mxu0 0.0
    %971 = vmatpush2.msra.mxu0 0.0
    %972 = vmatprep.subr.mxu0 0.0
    %973 = vmatpush2.msra.mxu0 0.0
    %974 = vmatprep.subr.mxu0 0.0
    %975 = vmatpush2.msra.mxu0 0.0
    %976 = vmatprep.subr.mxu0 0.0
    %977 = vmatpush2.msra.mxu0 0.0
    %978 = vmatprep.subr.mxu0 0.0
    %979 = vmatpush2.msra.mxu0 0.0
    %980 = vmatprep.subr.mxu0 0.0
    %981 = vmatpush2.msra.mxu0 0.0
    %982 = vmatprep.subr.mxu0 0.0
    %983 = vmatpush2.msra.mxu0 0.0
    %984 = vmatprep.subr.mxu0 0.0
    %985 = vmatpush2.msra.mxu0 0.0
    %986 = vmatprep.subr.mxu0 0.0
    %987 = vmatpush2.msra.mxu0 0.0
    %988 = vmatprep.subr.mxu0 0.0
    %989 = vmatpush2.msra.mxu0 0.0
    %990 = vmatprep.subr.mxu0 0.0
    %991 = vmatpush2.msra.mxu0 0.0
    %992 = vmatprep.subr.mxu0 0.0
    %993 = vmatpush2.msra.mxu0 0.0
    %994 = vmatprep.subr.mxu0 0.0
    %995 = vmatpush2.msra.mxu0 0.0
    %996 = vmatprep.subr.mxu0 0.0
    %997 = vmatpush2.msra.mxu0 0.0
    %998 = vmatprep.subr.mxu0 0.0
    %999 = vmatpush2.msra.mxu0 0.0
    %1000 = vmatprep.subr.mxu0 0.0
    %1001 = vmatpush2.msra.mxu0 0.0
    %1002 = vmatprep.mubr.f32.mxu0 0.0
    %1003 = vmatmul.mubr.f32.gmra.mxu0 %v936
    %v1004 = vpop.f32.mrf.mxu0
    %v1005 = vadd.f32 %v931, %v1004
    %v1006 = vpop.f32.mrf.mxu0
    %1007 = vdwg.mxu0
    %vm1008 = vcmask 64512
    %1009 = vst.msk [vmem:[#allocation5] sm:$0xff] %vm1008, %v1005
    // Predicated region
    $region26: #{lstm_forward.1} parent=1 // pred_check
      _
    $region27: #{lstm_forward.1} parent=1 // pred_check_branch
      %1011 = sbr.rel (0) target = $region29
    $region28: #{lstm_forward.1} parent=1 // pred_region
      %s1013 = ssub.s32 128, 128
      %1014 = vsyncadd [#allocation4], %s1013
      %s1016 = sshll.u32 [#allocation5], 4
      %s1017 = int_to_ptr.vmem [resolvable:$true] %s1016
      %1019 = dma.vmem_to_hbm [thread:$0]  %s1017, 128, %s5, [#allocation4]
    $region29: #{lstm_forward.1} parent=1 // pred_fallthru
      _
    // Predicated region
    $region30: #{lstm_forward.1} parent=1 // pred_check
      _
    $region31: #{lstm_forward.1} parent=1 // pred_check_branch
      %1021 = sbr.rel (0) target = $region33
    $region32: #{lstm_forward.1} parent=1 // pred_region
      %1022 = dma.done [#allocation4], 128
    $region33: #{lstm_forward.1} parent=1 // pred_fallthru
      _
    %1023 = vsyncpa [#allocation3], 1
    %1024 = vsyncpa [#allocation4], 1

</llo_original>
